<compile_context>
chip_gen: v7x
topology: tpu7x:2x2x1
jax: 0.10.0
libtpu: 0.0.40
codegen_flags: <defaults>
</compile_context>

<pallas_src>
import functools

import jax
import jax.numpy as jnp
from jax.experimental import pallas as pl
from jax.experimental.pallas import tpu as pltpu

NUM_HW_LAYERS = 2   # Highway num_layers — parameters exist but are dead in forward()
LANE = 128          # vreg lane width
SUBLANE = 8         # vreg sublane count (f32)


def _round_up(n, m):
    return ((n + m - 1) // m) * m


def fc_kernel(x_ref, w_ref, b_ref, o_ref):
    """One batch tile of  y = x @ W + b  (MXU matmul, f32 accumulate)."""
    o_ref[...] = (
        jnp.dot(x_ref[...], w_ref[...], preferred_element_type=jnp.float32)
        + b_ref[...]
    ).astype(o_ref.dtype)


def pack_fc_params(wfc, bfc):
    """Pad FC weight/bias to a lane-dense output width (multiple of 128).

    Weights are stored pre-transposed as [in, out] (PyTorch nn.Linear keeps
    [out, in]).  Call once at parameter-preparation time and reuse the packed
    params for every forward call.
    """
    _, dout = wfc.shape
    n_pad = _round_up(max(dout, LANE), LANE)
    wfc_p = jnp.pad(wfc, ((0, 0), (0, n_pad - dout)))
    bfc_p = jnp.pad(bfc.reshape(1, dout), ((0, 0), (0, n_pad - dout)))
    return wfc_p, bfc_p, dout


def _choose_tb(b_pad):
    """Pick a batch tile.

    - Tiny/medium batches: single block (per-step + per-call overhead
      dominates at ~0.35 us/step; one block removes it and needs no padding).
    - Large batches: the biggest tile in {2048,1024,512,256} that keeps
      batch padding minimal and leaves >=2 grid steps so the 'parallel' axis
      can actually shard across both v7x TensorCores.  512+ row tiles reach
      ~85% of the measured HBM streaming roofline (vs ~29% at 128).
    """
    if b_pad <= 512:
        return b_pad
    best = None
    for tb in (2048, 1024, 512, 256):
        pad = (-b_pad) % tb
        steps = (b_pad + pad) // tb
        if steps < 2:
            continue
        key = (pad, -tb)          # minimize padding, then prefer bigger tiles
        if best is None or key < best[1]:
            best = (tb, key)
    return best[0] if best is not None else b_pad


@functools.partial(jax.jit, static_argnames=("tb",))
def highway_residual_fc_padded(x, wfc_p, bfc_p, *, tb=None):
    """HBM-friendly forward: returns [B, N_PAD] (lane-padded columns).

    Columns >= dout are exactly zero; consumers that can fuse the narrowing
    should use this entry point to avoid an extra full HBM read/write pass.

    x:      [B, SIZE]      float32
    wfc_p:  [SIZE, N_PAD]  lane-padded FC weight (from pack_fc_params)
    bfc_p:  [1, N_PAD]     lane-padded FC bias
    """
    b, k = x.shape
    n_pad = wfc_p.shape[1]

    b_pad = _round_up(b, SUBLANE)
    if tb is None:
        tb = _choose_tb(b_pad)
    tb = _round_up(min(tb, b_pad), SUBLANE)
    b_pad = _round_up(b_pad, tb)
    if b_pad != b:
        # Kept minimal by _choose_tb; pad rows produce y = bias and are
        # sliced off below.
        x = jnp.pad(x, ((0, b_pad - b), (0, 0)))

    grid = (b_pad // tb,)
    itemsize = jnp.dtype(x.dtype).itemsize
    cost = pl.CostEstimate(
        flops=2 * b_pad * k * n_pad,
        transcendentals=0,
        bytes_accessed=(b_pad * k + k * n_pad + n_pad + b_pad * n_pad) * itemsize,
    )

    out = pl.pallas_call(
        fc_kernel,
        out_shape=jax.ShapeDtypeStruct((b_pad, n_pad), x.dtype),
        grid=grid,
        in_specs=[
            pl.BlockSpec((tb, k), lambda i: (i, 0)),     # x: marches over batch tiles
            pl.BlockSpec((k, n_pad), lambda i: (0, 0)),  # W: resident across the grid
            pl.BlockSpec((1, n_pad), lambda i: (0, 0)),  # b: resident across the grid
        ],
        out_specs=pl.BlockSpec((tb, n_pad), lambda i: (i, 0)),
        compiler_params=pltpu.CompilerParams(
            dimension_semantics=("parallel",),  # shards batch tiles across TCs on v7x
        ),
        cost_estimate=cost,
    )(x, wfc_p, bfc_p)

    if b_pad != b:
        out = out[:b]       # row slice only when padding was actually added
    return out


def highway_residual_fc(x, wfc_p, bfc_p, *, dout, tb=None):
    """Module-exact forward: returns [B, dout] (column-narrowed).

    Prefer `highway_residual_fc_padded` inside larger pipelines so the column
    narrowing fuses into the consumer instead of costing an extra HBM pass.
    """
    out = highway_residual_fc_padded(x, wfc_p, bfc_p, tb=tb)
    if out.shape[1] != dout:
        out = out[:, :dout]
    return out


def reference(x, wg, bg, wn, bn, wl, bl, wfc, bfc):
    """Plain-JAX reference of the exact PyTorch forward (eval mode)."""
    h = x
    for l in range(NUM_HW_LAYERS):
        g = jax.nn.sigmoid(h @ wg[l] + bg[l])
        n = jnp.maximum(h @ wn[l] + bn[l], 0.0)     # f = ReLU
        li = h @ wl[l] + bl[l]
        h = g * n + (1.0 - g) * li
    # HighwayResidualFC.forward discards h; ResidualFullyConnected with
    # layers=1 (and eval-mode dropout) is a single Linear, no activation.
    return x @ wfc + bfc


if __name__ == "__main__":
    B = 16         # batch_size (tiny batch -> single block, grid=(1,), no padding)
    SIZE = 32      # Highway `size` == dims[0]
    DOUT = 32      # dims[1]

    key = jax.random.PRNGKey(0)
    keys = jax.random.split(key, 9)
    bound = 1.0 / jnp.sqrt(SIZE)  # nn.Linear default init range

    def u(k, shape):
        return jax.random.uniform(k, shape, jnp.float32, -bound, bound)

    x = jax.random.normal(keys[0], (B, SIZE), jnp.float32)

    # Highway parameters (exist in the module, but are DEAD in forward(); they
    # are used only by the plain-JAX reference to demonstrate the output is
    # independent of them — they are never passed to the kernel).
    wg = u(keys[1], (NUM_HW_LAYERS, SIZE, SIZE))
    bg = u(keys[2], (NUM_HW_LAYERS, SIZE))
    wn = u(keys[3], (NUM_HW_LAYERS, SIZE, SIZE))
    bn = u(keys[4], (NUM_HW_LAYERS, SIZE))
    wl = u(keys[5], (NUM_HW_LAYERS, SIZE, SIZE))
    bl = u(keys[6], (NUM_HW_LAYERS, SIZE))

    # ResidualFullyConnected (layers=1): dims = [SIZE, DOUT]; weight as [in, out].
    wfc = u(keys[7], (SIZE, DOUT))
    bfc = u(keys[8], (1, DOUT))

    # One-time parameter packing (lane-dense padding), then the kernel call.
    wfc_p, bfc_p, dout = pack_fc_params(wfc, bfc)
    out = highway_residual_fc(x, wfc_p, bfc_p, dout=dout)
    out = jax.block_until_ready(out)

    ref = reference(x, wg, bg, wn, bn, wl, bl, wfc, bfc)
    assert out.shape == (B, DOUT)
    assert jnp.allclose(out, ref, atol=1e-5, rtol=1e-5)

    # Lane-padded fast path: extra columns are exactly zero.
    out_p = jax.block_until_ready(highway_residual_fc_padded(x, wfc_p, bfc_p))
    assert jnp.allclose(out_p[:, :dout], ref, atol=1e-5, rtol=1e-5)
    assert jnp.all(out_p[:, dout:] == 0.0)

    print("KERNEL_OK")
</pallas_src>

<mosaic_0001>
module attributes {stable_mosaic.version = 11 : i64} {
  func.func @fc_kernel(%arg0: i32, %arg1: memref<16x32xf32, #tpu.memory_space<vmem>>, %arg2: memref<32x128xf32, #tpu.memory_space<vmem>>, %arg3: memref<1x128xf32, #tpu.memory_space<vmem>>, %arg4: memref<16x128xf32, #tpu.memory_space<vmem>>) attributes {dimension_semantics = [#tpu.dimension_semantics<parallel>], iteration_bounds = array<i64: 1>, scalar_prefetch = 0 : i64, scratch_operands = 0 : i64, tpu.core_type = #tpu.core_type<tc>, window_params = [{transform_indices = @transform_0, window_bounds = array<i64: 16, 32>}, {pipeline_mode = #tpu.pipeline_mode<synchronous>, transform_indices = @transform_1, window_bounds = array<i64: 32, 128>}, {pipeline_mode = #tpu.pipeline_mode<synchronous>, transform_indices = @transform_2, window_bounds = array<i64: 1, 128>}, {transform_indices = @transform_3, window_bounds = array<i64: 16, 128>}]} {
    %c0 = arith.constant 0 : index
    %c0_0 = arith.constant 0 : index
    %0 = vector.load %arg1[%c0, %c0_0] : memref<16x32xf32, #tpu.memory_space<vmem>>, vector<16x32xf32>
    %c0_1 = arith.constant 0 : index
    %c0_2 = arith.constant 0 : index
    %1 = vector.load %arg2[%c0_1, %c0_2] : memref<32x128xf32, #tpu.memory_space<vmem>>, vector<32x128xf32>
    %cst = arith.constant dense<0.000000e+00> : vector<16x128xf32>
    %2 = tpu.matmul %0, %1, %cst {dimension_numbers = #tpu.dot_dimension_numbers<[1], [0], [0], [1], [0, 0, 1, 1], [], []>} : vector<16x32xf32>, vector<32x128xf32>, vector<16x128xf32> -> vector<16x128xf32>
    %c0_3 = arith.constant 0 : index
    %c0_4 = arith.constant 0 : index
    %3 = vector.load %arg3[%c0_3, %c0_4] : memref<1x128xf32, #tpu.memory_space<vmem>>, vector<1x128xf32>
    %4 = vector.broadcast %3 : vector<1x128xf32> to vector<16x128xf32>
    %5 = arith.addf %2, %4 : vector<16x128xf32>
    %c0_5 = arith.constant 0 : index
    %c0_6 = arith.constant 0 : index
    %6 = vector.load %arg4[%c0_5, %c0_6] : memref<16x128xf32, #tpu.memory_space<vmem>>, vector<16x128xf32>
    tpu.vector_store %arg4[%c0_5, %c0_6], %5 {strides = array<i32>} : memref<16x128xf32, #tpu.memory_space<vmem>>, vector<16x128xf32>,
    return
  }
  func.func @transform_0(%arg0: i32) -> (i32, i32) {
    %c0_i32 = arith.constant 0 : i32
    %c0_i32_0 = arith.constant 0 : i32
    return %arg0, %c0_i32 : i32, i32
  }
  func.func @transform_1(%arg0: i32) -> (i32, i32) {
    %c0_i32 = arith.constant 0 : i32
    %c0_i32_0 = arith.constant 0 : i32
    %c0_i32_1 = arith.constant 0 : i32
    return %c0_i32, %c0_i32_0 : i32, i32
  }
  func.func @transform_2(%arg0: i32) -> (i32, i32) {
    %c0_i32 = arith.constant 0 : i32
    %c0_i32_0 = arith.constant 0 : i32
    %c0_i32_1 = arith.constant 0 : i32
    return %c0_i32, %c0_i32_0 : i32, i32
  }
  func.func @transform_3(%arg0: i32) -> (i32, i32) {
    %c0_i32 = arith.constant 0 : i32
    %c0_i32_0 = arith.constant 0 : i32
    return %arg0, %c0_i32 : i32, i32
  }
}

</mosaic_0001>

<llo_original>
// kernel: highway_residual_fc_padded.1
$region0: #{highway_residual_fc_padded.1}
  #allocation0 [shape = 'u32[]', space=smem, size = 0x4, offset = 0x4, fixed_abs, tag = 'smem constant byte address 0x4 - core index']
  #allocation1 [shape = 'u32[144,128]{1,0:T(1,128)}', space=vmem, size = 0x12000, scoped, tag = 'internal scratch']
  %s0 = inlined_call_operand.hbm [shape: f32[16,32], index: 0, kind: input, shape index: {}]
  %s1 = inlined_call_operand.hbm [shape: f32[32,128], index: 1, kind: input, shape index: {}]
  %s2 = inlined_call_operand.vmem [shape: f32[1,128], index: 2, kind: input, shape index: {}]
  %s3 = inlined_call_operand.hbm [shape: f32[16,128], index: 3, kind: output, shape index: {}]
  %s4 = sld [smem:[#allocation0]]
  $region30: #{highway_residual_fc_padded.1} parent=0
    _
  %s6 = ssub.s32 1, %s4
  %s7 = scalar_select 0, %s6, %s4
  $region1: #{highway_residual_fc_padded.1} parent=0
    #allocation2 [shape = 'u8[8192]{0}', space=vmem, size = 0x2000, scoped, tag = 'input window, operand 0, single buffered']
    #allocation3 [shape = 's32[1]{0}', space=sflag, size = 0x4, scoped, tag = 'scoped memory for highway_residual_fc_padded.1']
    #allocation4 [shape = 's32[1]{0}', space=sflag, size = 0x4, scoped, tag = 'scoped memory for highway_residual_fc_padded.1']
    #allocation5 [shape = 'u8[16384]{0}', space=vmem, size = 0x4000, scoped, tag = 'input window, operand 1, single buffered']
    #allocation6 [shape = 's32[1]{0}', space=sflag, size = 0x4, scoped, tag = 'scoped memory for highway_residual_fc_padded.1']
    #allocation7 [shape = 'u8[8192]{0}', space=vmem, size = 0x2000, scoped, tag = 'output window, operand 0, single buffered']
    %8 = vsyncpa [#allocation3], 0
    %9 = vsyncpa [#allocation6], 0
    %10 = vsyncpa [#allocation4], 0
    // Predicated region
    $region2: #{highway_residual_fc_padded.1} parent=1 // pred_check
      _
    $region3: #{highway_residual_fc_padded.1} parent=1 // pred_check_branch
      %12 = sbr.rel (0) target = $region5
    $region4: #{highway_residual_fc_padded.1} parent=1 // pred_region
      %s14 = ssub.s32 256, 256
      %15 = vsyncadd [#allocation3], %s14
      %s16 = sshll.u32 [#allocation2], 4
      %s17 = int_to_ptr.vmem [resolvable:$true] %s16
      %22 = dma.hbm_to_vmem [thread:$0]  %s0, 256, %s17, [#allocation3], 128, 128, 8
    $region5: #{highway_residual_fc_padded.1} parent=1 // pred_fallthru
      _
    // Predicated region
    $region6: #{highway_residual_fc_padded.1} parent=1 // pred_check
      _
    $region7: #{highway_residual_fc_padded.1} parent=1 // pred_check_branch
      %24 = sbr.rel (0) target = $region9
    $region8: #{highway_residual_fc_padded.1} parent=1 // pred_region
      %s26 = ssub.s32 512, 512
      %27 = vsyncadd [#allocation6], %s26
      %s28 = sshll.u32 [#allocation5], 4
      %s29 = int_to_ptr.vmem [resolvable:$true] %s28
      %34 = dma.hbm_to_vmem [thread:$0]  %s1, 512, %s29, [#allocation6], 128, 128, 8
    $region9: #{highway_residual_fc_padded.1} parent=1 // pred_fallthru
      _
    // Predicated region
    $region10: #{highway_residual_fc_padded.1} parent=1 // pred_check
      _
    $region11: #{highway_residual_fc_padded.1} parent=1 // pred_check_branch
      %36 = sbr.rel (0) target = $region13
    $region12: #{highway_residual_fc_padded.1} parent=1 // pred_region
      _
    $region13: #{highway_residual_fc_padded.1} parent=1 // pred_fallthru
      _
    // Predicated region
    $region14: #{highway_residual_fc_padded.1} parent=1 // pred_check
      _
    $region15: #{highway_residual_fc_padded.1} parent=1 // pred_check_branch
      %38 = sbr.rel (0) target = $region17
    $region16: #{highway_residual_fc_padded.1} parent=1 // pred_region
      %39 = dma.done [#allocation3], 256
    $region17: #{highway_residual_fc_padded.1} parent=1 // pred_fallthru
      _
    // Predicated region
    $region18: #{highway_residual_fc_padded.1} parent=1 // pred_check
      _
    $region19: #{highway_residual_fc_padded.1} parent=1 // pred_check_branch
      %41 = sbr.rel (0) target = $region21
    $region20: #{highway_residual_fc_padded.1} parent=1 // pred_region
      %42 = dma.done [#allocation6], 512
    $region21: #{highway_residual_fc_padded.1} parent=1 // pred_fallthru
      _
    %v43 = vld [vmem:[#allocation2] sm:$0xff]
    %v44 = vld [vmem:[#allocation2 + $0x8] sm:$0xff]
    %v45 = vld [vmem:[#allocation5] sm:$0xff]
    %v46 = vld [vmem:[#allocation5 + $0x8] sm:$0xff]
    %v47 = vld [vmem:[#allocation5 + $0x10] sm:$0xff]
    %v48 = vld [vmem:[#allocation5 + $0x18] sm:$0xff]
    %v49 = vld [vmem:[%s2] sm:$0x1]
    %v51 = vlaneseq
    %v52 = vshrl.u32 %v51, 7
    %v53 = vsub.s32 0, %v52
    %v54 = vrot.slane %v49, %v53
    %vm56 = vcmask 261120
    %v58 = vsel %vm56, %v43, 0
    %v61 = vsel %vm56, %v44, 0
    %63 = vmatprep.subr.mxu0 0.0
    %64 = vmatpush1.msra.mxu0 %v45
    %65 = vmatprep.subr.mxu0 0.0
    %66 = vmatpush1.msra.mxu0 %v46
    %67 = vmatprep.subr.mxu0 0.0
    %68 = vmatpush1.msra.mxu0 %v47
    %69 = vmatprep.subr.mxu0 0.0
    %70 = vmatpush1.msra.mxu0 %v48
    %71 = vmatprep.subr.mxu0 0.0
    %72 = vmatpush1.msra.mxu0 0.0
    %73 = vmatprep.subr.mxu0 0.0
    %74 = vmatpush1.msra.mxu0 0.0
    %75 = vmatprep.subr.mxu0 0.0
    %76 = vmatpush1.msra.mxu0 0.0
    %77 = vmatprep.subr.mxu0 0.0
    %78 = vmatpush1.msra.mxu0 0.0
    %79 = vmatprep.subr.mxu0 0.0
    %80 = vmatpush1.msra.mxu0 0.0
    %81 = vmatprep.subr.mxu0 0.0
    %82 = vmatpush1.msra.mxu0 0.0
    %83 = vmatprep.subr.mxu0 0.0
    %84 = vmatpush1.msra.mxu0 0.0
    %85 = vmatprep.subr.mxu0 0.0
    %86 = vmatpush1.msra.mxu0 0.0
    %87 = vmatprep.subr.mxu0 0.0
    %88 = vmatpush1.msra.mxu0 0.0
    %89 = vmatprep.subr.mxu0 0.0
    %90 = vmatpush1.msra.mxu0 0.0
    %91 = vmatprep.subr.mxu0 0.0
    %92 = vmatpush1.msra.mxu0 0.0
    %93 = vmatprep.subr.mxu0 0.0
    %94 = vmatpush1.msra.mxu0 0.0
    %95 = vmatprep.subr.mxu0 0.0
    %96 = vmatpush1.msra.mxu0 0.0
    %97 = vmatprep.subr.mxu0 0.0
    %98 = vmatpush1.msra.mxu0 0.0
    %99 = vmatprep.subr.mxu0 0.0
    %100 = vmatpush1.msra.mxu0 0.0
    %101 = vmatprep.subr.mxu0 0.0
    %102 = vmatpush1.msra.mxu0 0.0
    %103 = vmatprep.subr.mxu0 0.0
    %104 = vmatpush1.msra.mxu0 0.0
    %105 = vmatprep.subr.mxu0 0.0
    %106 = vmatpush1.msra.mxu0 0.0
    %107 = vmatprep.subr.mxu0 0.0
    %108 = vmatpush1.msra.mxu0 0.0
    %109 = vmatprep.subr.mxu0 0.0
    %110 = vmatpush1.msra.mxu0 0.0
    %111 = vmatprep.subr.mxu0 0.0
    %112 = vmatpush1.msra.mxu0 0.0
    %113 = vmatprep.subr.mxu0 0.0
    %114 = vmatpush1.msra.mxu0 0.0
    %115 = vmatprep.subr.mxu0 0.0
    %116 = vmatpush1.msra.mxu0 0.0
    %117 = vmatprep.subr.mxu0 0.0
    %118 = vmatpush1.msra.mxu0 0.0
    %119 = vmatprep.subr.mxu0 0.0
    %120 = vmatpush1.msra.mxu0 0.0
    %121 = vmatprep.subr.mxu0 0.0
    %122 = vmatpush1.msra.mxu0 0.0
    %123 = vmatprep.subr.mxu0 0.0
    %124 = vmatpush1.msra.mxu0 0.0
    %125 = vmatprep.subr.mxu0 0.0
    %126 = vmatpush1.msra.mxu0 0.0
    %127 = vmatprep.mubr.f32.mxu0 0.0
    %128 = vmatmul.mubr.f32.gmra.mrb[0].mxu0 %v58
    %v129 = vpop.f32.mrb[0].mxu0
    %v130 = vadd.f32 %v54, %v129
    %v131 = vpop.f32.mrb[0].mxu0
    %132 = vmatprep.mubr.f32.mxu0 0.0
    %133 = vmatmul.mubr.f32.gmra.mrb[0].mxu0 %v61
    %v134 = vpop.f32.mrb[0].mxu0
    %v135 = vadd.f32 %v54, %v134
    %v136 = vpop.f32.mrb[0].mxu0
    %137 = vdwg.mxu0
    %138 = vst [vmem:[#allocation7] sm:$0xff] %v130
    %139 = vst [vmem:[#allocation7 + $0x8] sm:$0xff] %v135
    // Predicated region
    $region22: #{highway_residual_fc_padded.1} parent=1 // pred_check
      _
    $region23: #{highway_residual_fc_padded.1} parent=1 // pred_check_branch
      %141 = sbr.rel (0) target = $region25
    $region24: #{highway_residual_fc_padded.1} parent=1 // pred_region
      %s143 = ssub.s32 256, 256
      %144 = vsyncadd [#allocation4], %s143
      %s145 = sshll.u32 [#allocation7], 4
      %s146 = int_to_ptr.vmem [resolvable:$true] %s145
      %151 = dma.vmem_to_hbm [thread:$0]  %s146, 256, %s3, [#allocation4], 128, 128, 8
    $region25: #{highway_residual_fc_padded.1} parent=1 // pred_fallthru
      _
    // Predicated region
    $region26: #{highway_residual_fc_padded.1} parent=1 // pred_check
      _
    $region27: #{highway_residual_fc_padded.1} parent=1 // pred_check_branch
      %153 = sbr.rel (0) target = $region29
    $region28: #{highway_residual_fc_padded.1} parent=1 // pred_region
      %154 = dma.done [#allocation4], 256
    $region29: #{highway_residual_fc_padded.1} parent=1 // pred_fallthru
      _
    %155 = vsyncpa [#allocation3], 1
    %156 = vsyncpa [#allocation6], 1
    %157 = vsyncpa [#allocation4], 1

</llo_original>
